<compile_context>
chip_gen: v7x
topology: tpu7x:2x2x1
jax: 0.10.0
libtpu: 0.0.40
codegen_flags: <defaults>
</compile_context>

<pallas_src>
import jax
import jax.numpy as jnp
from jax.experimental import pallas as pl
from jax.experimental.pallas import tpu as pltpu


def _round_up(x, m):
    return (x + m - 1) // m * m


def _row_axis_semantics():
    # Only CORE_PARALLEL actually shards a grid axis across v7x's 2 TensorCores;
    # plain "parallel" is the known-good choice on single-TC chips (v5e/v6e).
    try:
        kind = str(jax.devices()[0].device_kind).lower()
    except Exception:  # pragma: no cover - defensive
        kind = ""
    if "v7" in kind:
        return (pltpu.CORE_PARALLEL,)
    return ("parallel",)


# ----------------------------------------------------------------------------
# Pallas kernel: fused  (x @ W) + b  ->  per-row BN affine  ->  ReLU  ->  mask
# ----------------------------------------------------------------------------
def _linear_bn_relu_mask_kernel(x_ref, w_ref, b_ref, aff_ref, o_ref):
    # x_ref:   (tm, D)  bf16 row tile of flattened (batch*length, feat) activations
    # w_ref:   (D, H)   bf16 weight, resident (constant block index) across row tiles
    # b_ref:   (1, H)   f32 linear bias
    # aff_ref: (tm, 3)  f32 per-row columns: [bn_scale, bn_shift, mask]
    y = jnp.dot(x_ref[...], w_ref[...], preferred_element_type=jnp.float32)
    y = y + b_ref[...]
    y = y * aff_ref[:, 0:1] + aff_ref[:, 1:2]      # folded BN running stats
    y = jnp.maximum(y, 0.0) * aff_ref[:, 2:3]      # ReLU, then mask
    o_ref[...] = y.astype(o_ref.dtype)


def _linear_bn_relu_mask_call(x, w_t, b_row, aff, *, tile_m,
                              out_dtype=jnp.float32):
    """x:(M,D) bf16, w_t:(D,H) bf16, b_row:(1,H) f32, aff:(M,3) f32 -> (M,H)."""
    M, D = x.shape
    H = w_t.shape[1]
    grid_m = pl.cdiv(M, tile_m)
    out_bytes = jnp.dtype(out_dtype).itemsize

    # VMEM budget: double-buffered streaming tiles + resident weight/bias + slack.
    need = (2 * tile_m * D * 2                     # x tiles (bf16)
            + 2 * D * H * 2                        # weight (bf16)
            + 2 * H * 4                            # bias
            + 2 * tile_m * 128 * 4                 # aff tiles (lane-padded)
            + 2 * tile_m * _round_up(H, 128) * out_bytes)   # out tiles
    vmem_limit = int(min(max(2 * need + (8 << 20), 32 << 20), 48 << 20))

    cost = pl.CostEstimate(
        flops=2 * M * D * H,
        transcendentals=0,
        bytes_accessed=(M * D * 2 + D * H * 2 + H * 4 + M * 3 * 4
                        + M * H * out_bytes),
    )

    return pl.pallas_call(
        _linear_bn_relu_mask_kernel,
        out_shape=jax.ShapeDtypeStruct((M, H), out_dtype),
        grid=(grid_m,),
        in_specs=[
            pl.BlockSpec((tile_m, D), lambda i: (i, 0)),
            pl.BlockSpec((D, H), lambda i: (0, 0)),
            pl.BlockSpec((1, H), lambda i: (0, 0)),
            pl.BlockSpec((tile_m, 3), lambda i: (i, 0)),
        ],
        out_specs=pl.BlockSpec((tile_m, H), lambda i: (i, 0)),
        compiler_params=pltpu.CompilerParams(
            dimension_semantics=_row_axis_semantics(),
            vmem_limit_bytes=vmem_limit,
        ),
        cost_estimate=cost,
    )(x, w_t, b_row, aff)


# ----------------------------------------------------------------------------
# Parameters for one Linear_layer (Linear + BatchNorm1d(length)); eval-mode stats.
# ----------------------------------------------------------------------------
def init_linear_layer_params(key, input_size, output_size, length):
    kw, kb = jax.random.split(key)
    w = jax.random.normal(kw, (output_size, input_size), jnp.float32) * 0.02
    b = jax.random.normal(kb, (output_size,), jnp.float32) * 0.02
    return dict(
        w=w, b=b,
        # Pre-transposed / pre-cast MXU operand, materialized ONCE at init
        # (no per-call W.T + pad copy).
        w_t=w.T.astype(jnp.bfloat16),
        gamma=jnp.ones((length,), jnp.float32),
        beta=jnp.zeros((length,), jnp.float32),
        running_mean=jnp.zeros((length,), jnp.float32),
        running_var=jnp.ones((length,), jnp.float32),
    )


def init_encoder_part(seed, res2d_size, i3d_size, rnn_size, length):
    key = jax.random.PRNGKey(seed)
    k1, k2 = jax.random.split(key)
    return dict(
        res_to_rnn=init_linear_layer_params(k1, res2d_size, rnn_size, length),
        i3d_to_rnn=init_linear_layer_params(k2, i3d_size, rnn_size, length),
    )


# ----------------------------------------------------------------------------
# Glue: fold BN running stats into per-row scale/shift; keep mask as own column.
# ----------------------------------------------------------------------------
def _per_row_affine_mask(p, mask, eps):
    inv_std = jax.lax.rsqrt(p["running_var"] + eps)       # (L,)
    scale_l = p["gamma"] * inv_std                        # (L,)
    shift_l = p["beta"] - p["running_mean"] * scale_l     # (L,)
    B, L = mask.shape
    scale_rows = jnp.broadcast_to(scale_l[None, :], (B, L)).reshape(B * L, 1)
    shift_rows = jnp.broadcast_to(shift_l[None, :], (B, L)).reshape(B * L, 1)
    mask_rows = mask.astype(jnp.float32).reshape(B * L, 1)
    return jnp.concatenate([scale_rows, shift_rows, mask_rows], axis=1)  # (M, 3)


@jax.jit
def encoder_part_forward(params, res2d_feats, i3d_feats, frame_mask, i3d_mask,
                         eps=1e-5):
    # TODO(synk): train-mode Dropout and batch-statistic BatchNorm are not
    # reproduced; this implements eval-mode forward semantics only.
    B, L, _ = res2d_feats.shape
    M = B * L
    tile_m = int(min(256, _round_up(M, 8)))

    def branch(p, feats, mask):
        D = feats.shape[2]
        H = p["b"].shape[0]
        x = feats.reshape(M, D).astype(jnp.bfloat16)      # bf16 MXU operand
        aff = _per_row_affine_mask(p, mask, eps)
        b_row = p["b"].reshape(1, H)
        out = _linear_bn_relu_mask_call(x, p["w_t"], b_row, aff, tile_m=tile_m)
        return out.reshape(B, L, H)

    return (branch(params["res_to_rnn"], res2d_feats, frame_mask),
            branch(params["i3d_to_rnn"], i3d_feats, i3d_mask))


# ----------------------------------------------------------------------------
# Pure-JAX f32 reference (sanity check)
# ----------------------------------------------------------------------------
def _reference_branch(p, feats, mask, eps=1e-5):
    y = jnp.einsum("bld,hd->blh", feats, p["w"]) + p["b"]
    inv_std = 1.0 / jnp.sqrt(p["running_var"] + eps)
    y = (y - p["running_mean"][None, :, None]) * inv_std[None, :, None]
    y = y * p["gamma"][None, :, None] + p["beta"][None, :, None]
    return jnp.maximum(y, 0.0) * mask.astype(jnp.float32)[..., None]


if __name__ == "__main__":
    # Small shapes consistent with the module: (B, length, feat_size)
    B, LENGTH = 2, 8
    RES2D, I3D, RNN = 64, 48, 32
    SEED = 0

    params = init_encoder_part(SEED, RES2D, I3D, RNN, LENGTH)

    key = jax.random.PRNGKey(0)
    k1, k2, k3, k4 = jax.random.split(key, 4)
    res2d_feats = jax.random.normal(k1, (B, LENGTH, RES2D), jnp.float32)
    i3d_feats = jax.random.normal(k2, (B, LENGTH, I3D), jnp.float32)
    frame_mask = (jax.random.uniform(k3, (B, LENGTH)) > 0.3).astype(jnp.int32)
    i3d_mask = (jax.random.uniform(k4, (B, LENGTH)) > 0.3).astype(jnp.int32)

    out_res, out_i3d = encoder_part_forward(params, res2d_feats, i3d_feats,
                                            frame_mask, i3d_mask)
    jax.block_until_ready((out_res, out_i3d))

    # Sanity check against the pure-JAX f32 reference (bf16 MXU inputs -> looser tol).
    ref_res = _reference_branch(params["res_to_rnn"], res2d_feats, frame_mask)
    ref_i3d = _reference_branch(params["i3d_to_rnn"], i3d_feats, i3d_mask)
    assert out_res.shape == (B, LENGTH, RNN) and out_i3d.shape == (B, LENGTH, RNN)
    assert jnp.allclose(out_res, ref_res, atol=2e-2, rtol=2e-2)
    assert jnp.allclose(out_i3d, ref_i3d, atol=2e-2, rtol=2e-2)

    print("KERNEL_OK")
</pallas_src>

<mosaic_0001>
module attributes {stable_mosaic.version = 11 : i64} {
  func.func @_linear_bn_relu_mask_kernel(%arg0: i32, %arg1: memref<16x64xbf16, #tpu.memory_space<vmem>>, %arg2: memref<64x32xbf16, #tpu.memory_space<vmem>>, %arg3: memref<1x32xf32, #tpu.memory_space<vmem>>, %arg4: memref<16x3xf32, #tpu.memory_space<vmem>>, %arg5: memref<16x32xf32, #tpu.memory_space<vmem>>) attributes {dimension_semantics = [#tpu.dimension_semantics<parallel>], iteration_bounds = array<i64: 1>, scalar_prefetch = 0 : i64, scratch_operands = 0 : i64, tpu.core_type = #tpu.core_type<tc>, window_params = [{transform_indices = @transform_0, window_bounds = array<i64: 16, 64>}, {pipeline_mode = #tpu.pipeline_mode<synchronous>, transform_indices = @transform_1, window_bounds = array<i64: 64, 32>}, {pipeline_mode = #tpu.pipeline_mode<synchronous>, transform_indices = @transform_2, window_bounds = array<i64: 1, 32>}, {transform_indices = @transform_3, window_bounds = array<i64: 16, 3>}, {transform_indices = @transform_4, window_bounds = array<i64: 16, 32>}]} {
    %c0 = arith.constant 0 : index
    %c0_0 = arith.constant 0 : index
    %0 = vector.load %arg1[%c0, %c0_0] : memref<16x64xbf16, #tpu.memory_space<vmem>>, vector<16x64xbf16>
    %c0_1 = arith.constant 0 : index
    %c0_2 = arith.constant 0 : index
    %1 = vector.load %arg2[%c0_1, %c0_2] : memref<64x32xbf16, #tpu.memory_space<vmem>>, vector<64x32xbf16>
    %cst = arith.constant dense<0.000000e+00> : vector<16x32xf32>
    %2 = tpu.matmul %0, %1, %cst {dimension_numbers = #tpu.dot_dimension_numbers<[1], [0], [0], [1], [0, 0, 1, 1], [], []>} : vector<16x64xbf16>, vector<64x32xbf16>, vector<16x32xf32> -> vector<16x32xf32>
    %c0_3 = arith.constant 0 : index
    %c0_4 = arith.constant 0 : index
    %3 = vector.load %arg3[%c0_3, %c0_4] : memref<1x32xf32, #tpu.memory_space<vmem>>, vector<1x32xf32>
    %4 = vector.broadcast %3 : vector<1x32xf32> to vector<16x32xf32>
    %5 = arith.addf %2, %4 : vector<16x32xf32>
    %c0_5 = arith.constant 0 : index
    %c0_6 = arith.constant 0 : index
    %6 = vector.load %arg4[%c0_5, %c0_6] : memref<16x3xf32, #tpu.memory_space<vmem>>, vector<16x1xf32>
    %7 = vector.broadcast %6 : vector<16x1xf32> to vector<16x32xf32>
    %8 = arith.mulf %5, %7 : vector<16x32xf32>
    %c0_7 = arith.constant 0 : index
    %c1 = arith.constant 1 : index
    %9 = vector.load %arg4[%c0_7, %c1] : memref<16x3xf32, #tpu.memory_space<vmem>>, vector<16x1xf32>
    %10 = vector.broadcast %9 : vector<16x1xf32> to vector<16x32xf32>
    %11 = arith.addf %8, %10 : vector<16x32xf32>
    %cst_8 = arith.constant 0.000000e+00 : f32
    %12 = vector.broadcast %cst_8 : f32 to vector<16x32xf32>
    %13 = arith.maximumf %11, %12 : vector<16x32xf32>
    %c0_9 = arith.constant 0 : index
    %c2 = arith.constant 2 : index
    %14 = vector.load %arg4[%c0_9, %c2] : memref<16x3xf32, #tpu.memory_space<vmem>>, vector<16x1xf32>
    %15 = vector.broadcast %14 : vector<16x1xf32> to vector<16x32xf32>
    %16 = arith.mulf %13, %15 : vector<16x32xf32>
    %c0_10 = arith.constant 0 : index
    %c0_11 = arith.constant 0 : index
    %17 = vector.load %arg5[%c0_10, %c0_11] : memref<16x32xf32, #tpu.memory_space<vmem>>, vector<16x32xf32>
    tpu.vector_store %arg5[%c0_10, %c0_11], %16 {strides = array<i32>} : memref<16x32xf32, #tpu.memory_space<vmem>>, vector<16x32xf32>,
    return
  }
  func.func @transform_0(%arg0: i32) -> (i32, i32) {
    %c0_i32 = arith.constant 0 : i32
    %c0_i32_0 = arith.constant 0 : i32
    return %arg0, %c0_i32 : i32, i32
  }
  func.func @transform_1(%arg0: i32) -> (i32, i32) {
    %c0_i32 = arith.constant 0 : i32
    %c0_i32_0 = arith.constant 0 : i32
    %c0_i32_1 = arith.constant 0 : i32
    return %c0_i32, %c0_i32_0 : i32, i32
  }
  func.func @transform_2(%arg0: i32) -> (i32, i32) {
    %c0_i32 = arith.constant 0 : i32
    %c0_i32_0 = arith.constant 0 : i32
    %c0_i32_1 = arith.constant 0 : i32
    return %c0_i32, %c0_i32_0 : i32, i32
  }
  func.func @transform_3(%arg0: i32) -> (i32, i32) {
    %c0_i32 = arith.constant 0 : i32
    %c0_i32_0 = arith.constant 0 : i32
    return %arg0, %c0_i32 : i32, i32
  }
  func.func @transform_4(%arg0: i32) -> (i32, i32) {
    %c0_i32 = arith.constant 0 : i32
    %c0_i32_0 = arith.constant 0 : i32
    return %arg0, %c0_i32 : i32, i32
  }
}

module attributes {stable_mosaic.version = 11 : i64} {
  func.func @_linear_bn_relu_mask_kernel(%arg0: i32, %arg1: memref<16x48xbf16, #tpu.memory_space<vmem>>, %arg2: memref<48x32xbf16, #tpu.memory_space<vmem>>, %arg3: memref<1x32xf32, #tpu.memory_space<vmem>>, %arg4: memref<16x3xf32, #tpu.memory_space<vmem>>, %arg5: memref<16x32xf32, #tpu.memory_space<vmem>>) attributes {dimension_semantics = [#tpu.dimension_semantics<parallel>], iteration_bounds = array<i64: 1>, scalar_prefetch = 0 : i64, scratch_operands = 0 : i64, tpu.core_type = #tpu.core_type<tc>, window_params = [{transform_indices = @transform_0, window_bounds = array<i64: 16, 48>}, {pipeline_mode = #tpu.pipeline_mode<synchronous>, transform_indices = @transform_1, window_bounds = array<i64: 48, 32>}, {pipeline_mode = #tpu.pipeline_mode<synchronous>, transform_indices = @transform_2, window_bounds = array<i64: 1, 32>}, {transform_indices = @transform_3, window_bounds = array<i64: 16, 3>}, {transform_indices = @transform_4, window_bounds = array<i64: 16, 32>}]} {
    %c0 = arith.constant 0 : index
    %c0_0 = arith.constant 0 : index
    %0 = vector.load %arg1[%c0, %c0_0] : memref<16x48xbf16, #tpu.memory_space<vmem>>, vector<16x48xbf16>
    %c0_1 = arith.constant 0 : index
    %c0_2 = arith.constant 0 : index
    %1 = vector.load %arg2[%c0_1, %c0_2] : memref<48x32xbf16, #tpu.memory_space<vmem>>, vector<48x32xbf16>
    %cst = arith.constant dense<0.000000e+00> : vector<16x32xf32>
    %2 = tpu.matmul %0, %1, %cst {dimension_numbers = #tpu.dot_dimension_numbers<[1], [0], [0], [1], [0, 0, 1, 1], [], []>} : vector<16x48xbf16>, vector<48x32xbf16>, vector<16x32xf32> -> vector<16x32xf32>
    %c0_3 = arith.constant 0 : index
    %c0_4 = arith.constant 0 : index
    %3 = vector.load %arg3[%c0_3, %c0_4] : memref<1x32xf32, #tpu.memory_space<vmem>>, vector<1x32xf32>
    %4 = vector.broadcast %3 : vector<1x32xf32> to vector<16x32xf32>
    %5 = arith.addf %2, %4 : vector<16x32xf32>
    %c0_5 = arith.constant 0 : index
    %c0_6 = arith.constant 0 : index
    %6 = vector.load %arg4[%c0_5, %c0_6] : memref<16x3xf32, #tpu.memory_space<vmem>>, vector<16x1xf32>
    %7 = vector.broadcast %6 : vector<16x1xf32> to vector<16x32xf32>
    %8 = arith.mulf %5, %7 : vector<16x32xf32>
    %c0_7 = arith.constant 0 : index
    %c1 = arith.constant 1 : index
    %9 = vector.load %arg4[%c0_7, %c1] : memref<16x3xf32, #tpu.memory_space<vmem>>, vector<16x1xf32>
    %10 = vector.broadcast %9 : vector<16x1xf32> to vector<16x32xf32>
    %11 = arith.addf %8, %10 : vector<16x32xf32>
    %cst_8 = arith.constant 0.000000e+00 : f32
    %12 = vector.broadcast %cst_8 : f32 to vector<16x32xf32>
    %13 = arith.maximumf %11, %12 : vector<16x32xf32>
    %c0_9 = arith.constant 0 : index
    %c2 = arith.constant 2 : index
    %14 = vector.load %arg4[%c0_9, %c2] : memref<16x3xf32, #tpu.memory_space<vmem>>, vector<16x1xf32>
    %15 = vector.broadcast %14 : vector<16x1xf32> to vector<16x32xf32>
    %16 = arith.mulf %13, %15 : vector<16x32xf32>
    %c0_10 = arith.constant 0 : index
    %c0_11 = arith.constant 0 : index
    %17 = vector.load %arg5[%c0_10, %c0_11] : memref<16x32xf32, #tpu.memory_space<vmem>>, vector<16x32xf32>
    tpu.vector_store %arg5[%c0_10, %c0_11], %16 {strides = array<i32>} : memref<16x32xf32, #tpu.memory_space<vmem>>, vector<16x32xf32>,
    return
  }
  func.func @transform_0(%arg0: i32) -> (i32, i32) {
    %c0_i32 = arith.constant 0 : i32
    %c0_i32_0 = arith.constant 0 : i32
    return %arg0, %c0_i32 : i32, i32
  }
  func.func @transform_1(%arg0: i32) -> (i32, i32) {
    %c0_i32 = arith.constant 0 : i32
    %c0_i32_0 = arith.constant 0 : i32
    %c0_i32_1 = arith.constant 0 : i32
    return %c0_i32, %c0_i32_0 : i32, i32
  }
  func.func @transform_2(%arg0: i32) -> (i32, i32) {
    %c0_i32 = arith.constant 0 : i32
    %c0_i32_0 = arith.constant 0 : i32
    %c0_i32_1 = arith.constant 0 : i32
    return %c0_i32, %c0_i32_0 : i32, i32
  }
  func.func @transform_3(%arg0: i32) -> (i32, i32) {
    %c0_i32 = arith.constant 0 : i32
    %c0_i32_0 = arith.constant 0 : i32
    return %arg0, %c0_i32 : i32, i32
  }
  func.func @transform_4(%arg0: i32) -> (i32, i32) {
    %c0_i32 = arith.constant 0 : i32
    %c0_i32_0 = arith.constant 0 : i32
    return %arg0, %c0_i32 : i32, i32
  }
}

</mosaic_0001>

<llo_original>
// kernel: encoder_part_forward.2
$region0: #{encoder_part_forward.2}
  #allocation0 [shape = 'u32[]', space=smem, size = 0x4, offset = 0x4, fixed_abs, tag = 'smem constant byte address 0x4 - core index']
  #allocation1 [shape = 'u32[144,128]{1,0:T(1,128)}', space=vmem, size = 0x12000, scoped, tag = 'internal scratch']
  %s0 = inlined_call_operand.vmem [shape: bf16[16,64], index: 0, kind: input, shape index: {}]
  %s1 = inlined_call_operand.vmem [shape: bf16[64,32], index: 1, kind: input, shape index: {}]
  %s2 = inlined_call_operand.vmem [shape: f32[1,32], index: 2, kind: input, shape index: {}]
  %s3 = inlined_call_operand.vmem [shape: f32[16,3], index: 3, kind: input, shape index: {}]
  %s4 = inlined_call_operand.hbm [shape: f32[16,32], index: 4, kind: output, shape index: {}]
  %s5 = sld [smem:[#allocation0]]
  $region26: #{encoder_part_forward.2} parent=0
    _
  %s7 = ssub.s32 1, %s5
  %s8 = scalar_select 0, %s7, %s5
  $region1: #{encoder_part_forward.2} parent=0
    #allocation2 [shape = 'u8[8192]{0}', space=vmem, size = 0x2000, scoped, tag = 'output window, operand 0, single buffered']
    #allocation3 [shape = 's32[1]{0}', space=sflag, size = 0x4, scoped, tag = 'scoped memory for encoder_part_forward.2']
    %9 = vsyncpa [#allocation3], 0
    // Predicated region
    $region2: #{encoder_part_forward.2} parent=1 // pred_check
      _
    $region3: #{encoder_part_forward.2} parent=1 // pred_check_branch
      %11 = sbr.rel (0) target = $region5
    $region4: #{encoder_part_forward.2} parent=1 // pred_region
      _
    $region5: #{encoder_part_forward.2} parent=1 // pred_fallthru
      _
    // Predicated region
    $region6: #{encoder_part_forward.2} parent=1 // pred_check
      _
    $region7: #{encoder_part_forward.2} parent=1 // pred_check_branch
      %13 = sbr.rel (0) target = $region9
    $region8: #{encoder_part_forward.2} parent=1 // pred_region
      _
    $region9: #{encoder_part_forward.2} parent=1 // pred_fallthru
      _
    // Predicated region
    $region10: #{encoder_part_forward.2} parent=1 // pred_check
      _
    $region11: #{encoder_part_forward.2} parent=1 // pred_check_branch
      %15 = sbr.rel (0) target = $region13
    $region12: #{encoder_part_forward.2} parent=1 // pred_region
      _
    $region13: #{encoder_part_forward.2} parent=1 // pred_fallthru
      _
    // Predicated region
    $region14: #{encoder_part_forward.2} parent=1 // pred_check
      _
    $region15: #{encoder_part_forward.2} parent=1 // pred_check_branch
      %17 = sbr.rel (0) target = $region17
    $region16: #{encoder_part_forward.2} parent=1 // pred_region
      _
    $region17: #{encoder_part_forward.2} parent=1 // pred_fallthru
      _
    %v19 = vld [vmem:[%s0] sm:$0xf]
    %v20 = vld [vmem:[%s0 + $0x4] sm:$0xf]
    %v21 = vld [vmem:[%s1] sm:$0xf]
    %v22 = vld [vmem:[%s1 + $0x4] sm:$0xf]
    %v23 = vld [vmem:[%s1 + $0x8] sm:$0xf]
    %v24 = vld [vmem:[%s1 + $0xc] sm:$0xf]
    %v25 = vld [vmem:[%s1 + $0x10] sm:$0xf]
    %v26 = vld [vmem:[%s1 + $0x14] sm:$0xf]
    %v27 = vld [vmem:[%s1 + $0x18] sm:$0xf]
    %v28 = vld [vmem:[%s1 + $0x1c] sm:$0xf]
    %v29 = vld [vmem:[%s2] sm:$0x1]
    %v31 = vlaneseq
    %v32 = vshrl.u32 %v31, 7
    %v33 = vsub.s32 0, %v32
    %v34 = vrot.slane %v29, %v33
    %v38 = vunpack.c.l.b16 %v19
    %v39 = vunpack.c.l.b16 %v20
    %v40 = vpack.c.b16 %v39, %v38
    %v49 = vunpack.c.l.b16 %v21
    %v50 = vunpack.c.l.b16 %v22
    %v51 = vunpack.c.l.b16 %v23
    %v52 = vunpack.c.l.b16 %v24
    %v53 = vunpack.c.l.b16 %v25
    %v54 = vunpack.c.l.b16 %v26
    %v55 = vunpack.c.l.b16 %v27
    %v56 = vunpack.c.l.b16 %v28
    %v57 = vpack.c.b16 %v50, %v49
    %v58 = vpack.c.b16 %v52, %v51
    %v59 = vpack.c.b16 %v54, %v53
    %v60 = vpack.c.b16 %v56, %v55
    %vm65 = vcmask 523264
    %v67 = vsel %vm65, %v40, 0
    %69 = vmatprep.subr.bf16.mxu0 0
    %70 = vmatpush1.bf16.msra.mxu0 %v57
    %71 = vmatprep.subr.bf16.mxu0 0
    %72 = vmatpush1.bf16.msra.mxu0 %v58
    %73 = vmatprep.subr.bf16.mxu0 0
    %74 = vmatpush1.bf16.msra.mxu0 %v59
    %75 = vmatprep.subr.bf16.mxu0 0
    %76 = vmatpush1.bf16.msra.mxu0 %v60
    %77 = vmatprep.subr.bf16.mxu0 0
    %78 = vmatpush1.bf16.msra.mxu0 0
    %79 = vmatprep.subr.bf16.mxu0 0
    %80 = vmatpush1.bf16.msra.mxu0 0
    %81 = vmatprep.subr.bf16.mxu0 0
    %82 = vmatpush1.bf16.msra.mxu0 0
    %83 = vmatprep.subr.bf16.mxu0 0
    %84 = vmatpush1.bf16.msra.mxu0 0
    %85 = vmatprep.subr.bf16.mxu0 0
    %86 = vmatpush1.bf16.msra.mxu0 0
    %87 = vmatprep.subr.bf16.mxu0 0
    %88 = vmatpush1.bf16.msra.mxu0 0
    %89 = vmatprep.subr.bf16.mxu0 0
    %90 = vmatpush1.bf16.msra.mxu0 0
    %91 = vmatprep.subr.bf16.mxu0 0
    %92 = vmatpush1.bf16.msra.mxu0 0
    %93 = vmatprep.subr.bf16.mxu0 0
    %94 = vmatpush1.bf16.msra.mxu0 0
    %95 = vmatprep.subr.bf16.mxu0 0
    %96 = vmatpush1.bf16.msra.mxu0 0
    %97 = vmatprep.subr.bf16.mxu0 0
    %98 = vmatpush1.bf16.msra.mxu0 0
    %99 = vmatprep.subr.bf16.mxu0 0
    %100 = vmatpush1.bf16.msra.mxu0 0
    %101 = vmatprep.mubr.bf16.mxu0 0
    %102 = vmatmul.mubr.bf16.gmra.mrb[0].mxu0 %v67
    %v103 = vpop.f32.mrb[0].mxu0
    %v104 = vadd.f32 %v34, %v103
    %v105 = vpop.f32.mrb[0].mxu0
    %v106 = vpop.f32.mrb[0].mxu0
    %v107 = vadd.f32 %v34, %v106
    %v108 = vpop.f32.mrb[0].mxu0
    %109 = vdwg.mxu0
    %v110 = vld [vmem:[%s3] sm:$0xff]
    %v111 = vld [vmem:[%s3 + $0x8] sm:$0xff]
    %113 = vset.pattern.permute.xlu0 0
    %114 = vperm.xlu0 %113, %v110
    %v115 = vpop.permute.xlu0 %114
    %118 = vset.pattern.permute.xlu0 0
    %119 = vperm.xlu0 %118, %v111
    %v120 = vpop.permute.xlu0 %119
    %v122 = vmul.f32 %v104, %v115
    %v123 = vmul.f32 %v107, %v120
    %124 = vset.pattern.permute.xlu0 1
    %125 = vperm.xlu0 %124, %v110
    %v126 = vpop.permute.xlu0 %125
    %128 = vset.pattern.permute.xlu0 1
    %129 = vperm.xlu0 %128, %v111
    %v130 = vpop.permute.xlu0 %129
    %v132 = vadd.f32 %v122, %v126
    %v133 = vadd.f32 %v123, %v130
    %v134 = vmax.f32 %v132, 0.0
    %v135 = vmax.f32 %v133, 0.0
    %136 = vset.pattern.permute.xlu0 2
    %137 = vperm.xlu0 %136, %v110
    %v138 = vpop.permute.xlu0 %137
    %140 = vset.pattern.permute.xlu0 2
    %141 = vperm.xlu0 %140, %v111
    %v142 = vpop.permute.xlu0 %141
    %v144 = vmul.f32 %v134, %v138
    %v145 = vmul.f32 %v135, %v142
    %vm146 = vcmask 261120
    %147 = vst.msk [vmem:[#allocation2] sm:$0xff] %vm146, %v144
    %148 = vst.msk [vmem:[#allocation2 + $0x8] sm:$0xff] %vm146, %v145
    // Predicated region
    $region18: #{encoder_part_forward.2} parent=1 // pred_check
      _
    $region19: #{encoder_part_forward.2} parent=1 // pred_check_branch
      %150 = sbr.rel (0) target = $region21
    $region20: #{encoder_part_forward.2} parent=1 // pred_region
      %s152 = ssub.s32 256, 256
      %153 = vsyncadd [#allocation3], %s152
      %s154 = sshll.u32 [#allocation2], 4
      %s155 = int_to_ptr.vmem [resolvable:$true] %s154
      %160 = dma.vmem_to_hbm [thread:$0]  %s155, 256, %s4, [#allocation3], 128, 128, 8
    $region21: #{encoder_part_forward.2} parent=1 // pred_fallthru
      _
    // Predicated region
    $region22: #{encoder_part_forward.2} parent=1 // pred_check
      _
    $region23: #{encoder_part_forward.2} parent=1 // pred_check_branch
      %162 = sbr.rel (0) target = $region25
    $region24: #{encoder_part_forward.2} parent=1 // pred_region
      %163 = dma.done [#allocation3], 256
    $region25: #{encoder_part_forward.2} parent=1 // pred_fallthru
      _
    %164 = vsyncpa [#allocation3], 1

// kernel: encoder_part_forward.3
$region0: #{encoder_part_forward.3}
  #allocation0 [shape = 'u32[]', space=smem, size = 0x4, offset = 0x4, fixed_abs, tag = 'smem constant byte address 0x4 - core index']
  #allocation1 [shape = 'u32[144,128]{1,0:T(1,128)}', space=vmem, size = 0x12000, scoped, tag = 'internal scratch']
  %s0 = inlined_call_operand.vmem [shape: bf16[16,48], index: 0, kind: input, shape index: {}]
  %s1 = inlined_call_operand.vmem [shape: bf16[48,32], index: 1, kind: input, shape index: {}]
  %s2 = inlined_call_operand.vmem [shape: f32[1,32], index: 2, kind: input, shape index: {}]
  %s3 = inlined_call_operand.vmem [shape: f32[16,3], index: 3, kind: input, shape index: {}]
  %s4 = inlined_call_operand.hbm [shape: f32[16,32], index: 4, kind: output, shape index: {}]
  %s5 = sld [smem:[#allocation0]]
  $region26: #{encoder_part_forward.3} parent=0
    _
  %s7 = ssub.s32 1, %s5
  %s8 = scalar_select 0, %s7, %s5
  $region1: #{encoder_part_forward.3} parent=0
    #allocation2 [shape = 'u8[8192]{0}', space=vmem, size = 0x2000, scoped, tag = 'output window, operand 0, single buffered']
    #allocation3 [shape = 's32[1]{0}', space=sflag, size = 0x4, scoped, tag = 'scoped memory for encoder_part_forward.3']
    %9 = vsyncpa [#allocation3], 0
    // Predicated region
    $region2: #{encoder_part_forward.3} parent=1 // pred_check
      _
    $region3: #{encoder_part_forward.3} parent=1 // pred_check_branch
      %11 = sbr.rel (0) target = $region5
    $region4: #{encoder_part_forward.3} parent=1 // pred_region
      _
    $region5: #{encoder_part_forward.3} parent=1 // pred_fallthru
      _
    // Predicated region
    $region6: #{encoder_part_forward.3} parent=1 // pred_check
      _
    $region7: #{encoder_part_forward.3} parent=1 // pred_check_branch
      %13 = sbr.rel (0) target = $region9
    $region8: #{encoder_part_forward.3} parent=1 // pred_region
      _
    $region9: #{encoder_part_forward.3} parent=1 // pred_fallthru
      _
    // Predicated region
    $region10: #{encoder_part_forward.3} parent=1 // pred_check
      _
    $region11: #{encoder_part_forward.3} parent=1 // pred_check_branch
      %15 = sbr.rel (0) target = $region13
    $region12: #{encoder_part_forward.3} parent=1 // pred_region
      _
    $region13: #{encoder_part_forward.3} parent=1 // pred_fallthru
      _
    // Predicated region
    $region14: #{encoder_part_forward.3} parent=1 // pred_check
      _
    $region15: #{encoder_part_forward.3} parent=1 // pred_check_branch
      %17 = sbr.rel (0) target = $region17
    $region16: #{encoder_part_forward.3} parent=1 // pred_region
      _
    $region17: #{encoder_part_forward.3} parent=1 // pred_fallthru
      _
    %v19 = vld [vmem:[%s0] sm:$0xf]
    %v20 = vld [vmem:[%s0 + $0x4] sm:$0xf]
    %v21 = vld [vmem:[%s1] sm:$0xf]
    %v22 = vld [vmem:[%s1 + $0x4] sm:$0xf]
    %v23 = vld [vmem:[%s1 + $0x8] sm:$0xf]
    %v24 = vld [vmem:[%s1 + $0xc] sm:$0xf]
    %v25 = vld [vmem:[%s1 + $0x10] sm:$0xf]
    %v26 = vld [vmem:[%s1 + $0x14] sm:$0xf]
    %v27 = vld [vmem:[%s2] sm:$0x1]
    %v29 = vlaneseq
    %v30 = vshrl.u32 %v29, 7
    %v31 = vsub.s32 0, %v30
    %v32 = vrot.slane %v27, %v31
    %v36 = vunpack.c.l.b16 %v19
    %v37 = vunpack.c.l.b16 %v20
    %v38 = vpack.c.b16 %v37, %v36
    %v45 = vunpack.c.l.b16 %v21
    %v46 = vunpack.c.l.b16 %v22
    %v47 = vunpack.c.l.b16 %v23
    %v48 = vunpack.c.l.b16 %v24
    %v49 = vunpack.c.l.b16 %v25
    %v50 = vunpack.c.l.b16 %v26
    %v51 = vpack.c.b16 %v46, %v45
    %v52 = vpack.c.b16 %v48, %v47
    %v53 = vpack.c.b16 %v50, %v49
    %vm57 = vcmask 392192
    %v59 = vsel %vm57, %v38, 0
    %61 = vmatprep.subr.bf16.mxu0 0
    %62 = vmatpush1.bf16.msra.mxu0 %v51
    %63 = vmatprep.subr.bf16.mxu0 0
    %64 = vmatpush1.bf16.msra.mxu0 %v52
    %65 = vmatprep.subr.bf16.mxu0 0
    %66 = vmatpush1.bf16.msra.mxu0 %v53
    %67 = vmatprep.subr.bf16.mxu0 0
    %68 = vmatpush1.bf16.msra.mxu0 0
    %69 = vmatprep.subr.bf16.mxu0 0
    %70 = vmatpush1.bf16.msra.mxu0 0
    %71 = vmatprep.subr.bf16.mxu0 0
    %72 = vmatpush1.bf16.msra.mxu0 0
    %73 = vmatprep.subr.bf16.mxu0 0
    %74 = vmatpush1.bf16.msra.mxu0 0
    %75 = vmatprep.subr.bf16.mxu0 0
    %76 = vmatpush1.bf16.msra.mxu0 0
    %77 = vmatprep.subr.bf16.mxu0 0
    %78 = vmatpush1.bf16.msra.mxu0 0
    %79 = vmatprep.subr.bf16.mxu0 0
    %80 = vmatpush1.bf16.msra.mxu0 0
    %81 = vmatprep.subr.bf16.mxu0 0
    %82 = vmatpush1.bf16.msra.mxu0 0
    %83 = vmatprep.subr.bf16.mxu0 0
    %84 = vmatpush1.bf16.msra.mxu0 0
    %85 = vmatprep.subr.bf16.mxu0 0
    %86 = vmatpush1.bf16.msra.mxu0 0
    %87 = vmatprep.subr.bf16.mxu0 0
    %88 = vmatpush1.bf16.msra.mxu0 0
    %89 = vmatprep.subr.bf16.mxu0 0
    %90 = vmatpush1.bf16.msra.mxu0 0
    %91 = vmatprep.subr.bf16.mxu0 0
    %92 = vmatpush1.bf16.msra.mxu0 0
    %93 = vmatprep.mubr.bf16.mxu0 0
    %94 = vmatmul.mubr.bf16.gmra.mrb[0].mxu0 %v59
    %v95 = vpop.f32.mrb[0].mxu0
    %v96 = vadd.f32 %v32, %v95
    %v97 = vpop.f32.mrb[0].mxu0
    %v98 = vpop.f32.mrb[0].mxu0
    %v99 = vadd.f32 %v32, %v98
    %v100 = vpop.f32.mrb[0].mxu0
    %101 = vdwg.mxu0
    %v102 = vld [vmem:[%s3] sm:$0xff]
    %v103 = vld [vmem:[%s3 + $0x8] sm:$0xff]
    %105 = vset.pattern.permute.xlu0 0
    %106 = vperm.xlu0 %105, %v102
    %v107 = vpop.permute.xlu0 %106
    %110 = vset.pattern.permute.xlu0 0
    %111 = vperm.xlu0 %110, %v103
    %v112 = vpop.permute.xlu0 %111
    %v114 = vmul.f32 %v96, %v107
    %v115 = vmul.f32 %v99, %v112
    %116 = vset.pattern.permute.xlu0 1
    %117 = vperm.xlu0 %116, %v102
    %v118 = vpop.permute.xlu0 %117
    %120 = vset.pattern.permute.xlu0 1
    %121 = vperm.xlu0 %120, %v103
    %v122 = vpop.permute.xlu0 %121
    %v124 = vadd.f32 %v114, %v118
    %v125 = vadd.f32 %v115, %v122
    %v126 = vmax.f32 %v124, 0.0
    %v127 = vmax.f32 %v125, 0.0
    %128 = vset.pattern.permute.xlu0 2
    %129 = vperm.xlu0 %128, %v102
    %v130 = vpop.permute.xlu0 %129
    %132 = vset.pattern.permute.xlu0 2
    %133 = vperm.xlu0 %132, %v103
    %v134 = vpop.permute.xlu0 %133
    %v136 = vmul.f32 %v126, %v130
    %v137 = vmul.f32 %v127, %v134
    %vm138 = vcmask 261120
    %139 = vst.msk [vmem:[#allocation2] sm:$0xff] %vm138, %v136
    %140 = vst.msk [vmem:[#allocation2 + $0x8] sm:$0xff] %vm138, %v137
    // Predicated region
    $region18: #{encoder_part_forward.3} parent=1 // pred_check
      _
    $region19: #{encoder_part_forward.3} parent=1 // pred_check_branch
      %142 = sbr.rel (0) target = $region21
    $region20: #{encoder_part_forward.3} parent=1 // pred_region
      %s144 = ssub.s32 256, 256
      %145 = vsyncadd [#allocation3], %s144
      %s146 = sshll.u32 [#allocation2], 4
      %s147 = int_to_ptr.vmem [resolvable:$true] %s146
      %152 = dma.vmem_to_hbm [thread:$0]  %s147, 256, %s4, [#allocation3], 128, 128, 8
    $region21: #{encoder_part_forward.3} parent=1 // pred_fallthru
      _
    // Predicated region
    $region22: #{encoder_part_forward.3} parent=1 // pred_check
      _
    $region23: #{encoder_part_forward.3} parent=1 // pred_check_branch
      %154 = sbr.rel (0) target = $region25
    $region24: #{encoder_part_forward.3} parent=1 // pred_region
      %155 = dma.done [#allocation3], 256
    $region25: #{encoder_part_forward.3} parent=1 // pred_fallthru
      _
    %156 = vsyncpa [#allocation3], 1

</llo_original>
